<compile_context>
chip_gen: v5e
topology: v5e:2x2
jax: 0.10.0
libtpu: 0.0.40
codegen_flags: <defaults>
</compile_context>

<pallas_src>
import functools
import math

import jax
import jax.numpy as jnp
from jax.experimental import pallas as pl
from jax.experimental.pallas import tpu as pltpu


def _normalised_sigmoid_kernel(s_ref, o_ref, *, p: float, eps: float,
                               d: int, k: int, compute_dtype):
    """One (TR, k*d) tile: each physical row holds k logical rows of length d."""
    s = s_ref[...].astype(compute_dtype)
    a = jax.nn.sigmoid(s)                       # strictly positive -> |a| == a

    out_parts = []
    for g in range(k):                          # k is static and small (<= 16)
        a_g = a[:, g * d:(g + 1) * d]           # static lane slice, (TR, d)
        if p == 1.0:
            n_g = jnp.sum(a_g.astype(jnp.float32), axis=-1, keepdims=True)
        elif p == 2.0:
            af = a_g.astype(jnp.float32)
            n_g = jnp.sqrt(jnp.sum(af * af, axis=-1, keepdims=True))
        else:
            af = a_g.astype(jnp.float32)
            n_g = jnp.power(
                jnp.sum(jnp.power(af, p), axis=-1, keepdims=True), 1.0 / p)
        # One exact reciprocal per (tile-row, logical-row) instead of an
        # elementwise divide: cuts EUP work by ~d, rest is cheap VPU mul.
        inv_g = pl.reciprocal(jnp.maximum(n_g, eps), approx=False)   # (TR, 1)
        out_parts.append(a_g.astype(jnp.float32) * inv_g)

    out = out_parts[0] if k == 1 else jnp.concatenate(out_parts, axis=-1)
    o_ref[...] = out.astype(o_ref.dtype)


def _vmem_capacity_bytes() -> int:
    try:
        return int(pltpu.get_tpu_info().vmem_capacity_bytes)
    except Exception:
        return 64 << 20     # conservative fallback (v7x per-TensorCore VMEM)


def _is_bf16_vpu_device() -> bool:
    # bf16 VPU/EUP: v6e / v7x. Older generations need the f32 elementwise path.
    try:
        kind = jax.devices()[0].device_kind.lower()
    except Exception:
        return False
    return not any(t in kind for t in ("v2", "v3", "v4", "v5"))


def _pick_row_tile(rows: int, cols: int, itemsize: int,
                   target_bytes: int = 2 << 20) -> int:
    """~2 MiB blocks (amortise ~0.35us/step), multiple of 8 rows, >=2 steps."""
    if rows <= 8:
        return rows                              # full extent, single step
    tr = (target_bytes // max(cols * itemsize, 1)) // 8 * 8
    tr = max(tr, 8)
    # Keep at least 2 grid steps so a v7x megacore can split rows across TCs.
    tr = min(tr, max(8, (rows // 2) // 8 * 8))
    return tr


def normalised_sigmoid(s: jax.Array, p: float = 1.0, dim: int = -1) -> jax.Array:
    """Pallas implementation of NormalisedSigmoid (sigmoid + F.normalize)."""
    eps = 1e-12           # torch.nn.functional.normalize default

    ndim = s.ndim
    dim = dim % ndim
    perm = None
    if dim != ndim - 1:
        # TODO(synk): fold non-last-dim normalisation into the kernel (reduce
        # over the sublane axis) instead of paying an extra HBM round-trip.
        perm = tuple(i for i in range(ndim) if i != dim) + (dim,)
        s = jnp.transpose(s, perm)

    lead_shape = s.shape[:-1]
    D = s.shape[-1]
    R = math.prod(lead_shape) if lead_shape else 1

    # Lane-dense packing: fold k logical rows into one 128-lane physical row.
    k = 1
    if D < 128 and 128 % D == 0 and R % (128 // D) == 0:
        k = 128 // D
    Rp, Dp = R // k, D * k
    s2 = s.reshape(Rp, Dp)

    compute_dtype = jnp.float32
    if s2.dtype == jnp.bfloat16 and _is_bf16_vpu_device():
        compute_dtype = jnp.bfloat16

    TR = _pick_row_tile(Rp, Dp, s2.dtype.itemsize)
    grid = (pl.cdiv(Rp, TR),)

    # Scoped VMEM budget: half of physical capacity, capped at 64 MiB
    # (-> 64 MiB on v5e/v6e's 128 MiB, 32 MiB on v7x's 64 MiB).
    vmem_limit = int(min(_vmem_capacity_bytes() // 2, 64 << 20))

    kernel = functools.partial(
        _normalised_sigmoid_kernel, p=float(p), eps=eps, d=D, k=k,
        compute_dtype=compute_dtype)

    out2 = pl.pallas_call(
        kernel,
        out_shape=jax.ShapeDtypeStruct((Rp, Dp), s2.dtype),
        grid_spec=pltpu.PrefetchScalarGridSpec(
            num_scalar_prefetch=0,
            grid=grid,
            in_specs=[pl.BlockSpec((TR, Dp), lambda i: (i, 0))],
            out_specs=pl.BlockSpec((TR, Dp), lambda i: (i, 0)),
        ),
        compiler_params=pltpu.CompilerParams(
            dimension_semantics=("parallel",),
            vmem_limit_bytes=vmem_limit,
        ),
    )(s2)

    out = out2.reshape(lead_shape + (D,))
    if perm is not None:
        inv_perm = [0] * ndim
        for i, axis in enumerate(perm):
            inv_perm[axis] = i
        out = jnp.transpose(out, inv_perm)
    return out


if __name__ == "__main__":
    key = jax.random.PRNGKey(0)
    # Small NCHW-like input, normalised over the last axis (W).
    x = jax.random.normal(key, (2, 4, 16, 16), dtype=jnp.float32)

    out = normalised_sigmoid(x, p=1.0, dim=-1)
    out = jax.block_until_ready(out)

    # Reference check in plain JAX (same math as the PyTorch module).
    a = jax.nn.sigmoid(x)
    ref = a / jnp.maximum(jnp.sum(jnp.abs(a), axis=-1, keepdims=True), 1e-12)
    assert out.shape == x.shape and out.dtype == x.dtype
    assert jnp.max(jnp.abs(out - ref)) < 1e-5

    print("KERNEL_OK")
</pallas_src>

<mosaic_0001>
module attributes {stable_mosaic.version = 11 : i64} {
  func.func @_normalised_sigmoid_kernel(%arg0: i32, %arg1: memref<8x128xf32, #tpu.memory_space<vmem>>, %arg2: memref<8x128xf32, #tpu.memory_space<vmem>>) attributes {dimension_semantics = [#tpu.dimension_semantics<parallel>], iteration_bounds = array<i64: 2>, scalar_prefetch = 0 : i64, scratch_operands = 0 : i64, tpu.core_type = #tpu.core_type<tc>, window_params = [{transform_indices = @transform_0, window_bounds = array<i64: 8, 128>}, {transform_indices = @transform_1, window_bounds = array<i64: 8, 128>}]} {
    %c0 = arith.constant 0 : index
    %c0_0 = arith.constant 0 : index
    %0 = vector.load %arg1[%c0, %c0_0] : memref<8x128xf32, #tpu.memory_space<vmem>>, vector<8x128xf32>
    %1 = arith.negf %0 : vector<8x128xf32>
    %2 = math.exp %1 : vector<8x128xf32>
    %cst = arith.constant 1.000000e+00 : f32
    %3 = vector.broadcast %cst : f32 to vector<8x128xf32>
    %4 = arith.addf %3, %2 : vector<8x128xf32>
    %5 = arith.divf %3, %4 : vector<8x128xf32>
    %6 = vector.extract_strided_slice %5 {offsets = [0, 0], sizes = [8, 16], strides = [1, 1]} : vector<8x128xf32> to vector<8x16xf32>
    %cst_1 = arith.constant dense<0.000000e+00> : vector<8xf32>
    %7 = vector.multi_reduction <add>, %6, %cst_1 [1] : vector<8x16xf32> to vector<8xf32>
    %8 = vector.shape_cast %7 : vector<8xf32> to vector<8x1xf32>
    %cst_2 = arith.constant 9.99999996E-13 : f32
    %9 = vector.broadcast %cst_2 : f32 to vector<8x1xf32>
    %10 = arith.maximumf %8, %9 : vector<8x1xf32>
    %11 = tpu.reciprocal %10 : vector<8x1xf32> -> vector<8x1xf32>
    %12 = vector.broadcast %11 : vector<8x1xf32> to vector<8x16xf32>
    %13 = arith.mulf %6, %12 : vector<8x16xf32>
    %14 = vector.extract_strided_slice %5 {offsets = [0, 16], sizes = [8, 16], strides = [1, 1]} : vector<8x128xf32> to vector<8x16xf32>
    %cst_3 = arith.constant dense<0.000000e+00> : vector<8xf32>
    %15 = vector.multi_reduction <add>, %14, %cst_3 [1] : vector<8x16xf32> to vector<8xf32>
    %16 = vector.shape_cast %15 : vector<8xf32> to vector<8x1xf32>
    %cst_4 = arith.constant 9.99999996E-13 : f32
    %17 = vector.broadcast %cst_4 : f32 to vector<8x1xf32>
    %18 = arith.maximumf %16, %17 : vector<8x1xf32>
    %19 = tpu.reciprocal %18 : vector<8x1xf32> -> vector<8x1xf32>
    %20 = vector.broadcast %19 : vector<8x1xf32> to vector<8x16xf32>
    %21 = arith.mulf %14, %20 : vector<8x16xf32>
    %22 = vector.extract_strided_slice %5 {offsets = [0, 32], sizes = [8, 16], strides = [1, 1]} : vector<8x128xf32> to vector<8x16xf32>
    %cst_5 = arith.constant dense<0.000000e+00> : vector<8xf32>
    %23 = vector.multi_reduction <add>, %22, %cst_5 [1] : vector<8x16xf32> to vector<8xf32>
    %24 = vector.shape_cast %23 : vector<8xf32> to vector<8x1xf32>
    %cst_6 = arith.constant 9.99999996E-13 : f32
    %25 = vector.broadcast %cst_6 : f32 to vector<8x1xf32>
    %26 = arith.maximumf %24, %25 : vector<8x1xf32>
    %27 = tpu.reciprocal %26 : vector<8x1xf32> -> vector<8x1xf32>
    %28 = vector.broadcast %27 : vector<8x1xf32> to vector<8x16xf32>
    %29 = arith.mulf %22, %28 : vector<8x16xf32>
    %30 = vector.extract_strided_slice %5 {offsets = [0, 48], sizes = [8, 16], strides = [1, 1]} : vector<8x128xf32> to vector<8x16xf32>
    %cst_7 = arith.constant dense<0.000000e+00> : vector<8xf32>
    %31 = vector.multi_reduction <add>, %30, %cst_7 [1] : vector<8x16xf32> to vector<8xf32>
    %32 = vector.shape_cast %31 : vector<8xf32> to vector<8x1xf32>
    %cst_8 = arith.constant 9.99999996E-13 : f32
    %33 = vector.broadcast %cst_8 : f32 to vector<8x1xf32>
    %34 = arith.maximumf %32, %33 : vector<8x1xf32>
    %35 = tpu.reciprocal %34 : vector<8x1xf32> -> vector<8x1xf32>
    %36 = vector.broadcast %35 : vector<8x1xf32> to vector<8x16xf32>
    %37 = arith.mulf %30, %36 : vector<8x16xf32>
    %38 = vector.extract_strided_slice %5 {offsets = [0, 64], sizes = [8, 16], strides = [1, 1]} : vector<8x128xf32> to vector<8x16xf32>
    %cst_9 = arith.constant dense<0.000000e+00> : vector<8xf32>
    %39 = vector.multi_reduction <add>, %38, %cst_9 [1] : vector<8x16xf32> to vector<8xf32>
    %40 = vector.shape_cast %39 : vector<8xf32> to vector<8x1xf32>
    %cst_10 = arith.constant 9.99999996E-13 : f32
    %41 = vector.broadcast %cst_10 : f32 to vector<8x1xf32>
    %42 = arith.maximumf %40, %41 : vector<8x1xf32>
    %43 = tpu.reciprocal %42 : vector<8x1xf32> -> vector<8x1xf32>
    %44 = vector.broadcast %43 : vector<8x1xf32> to vector<8x16xf32>
    %45 = arith.mulf %38, %44 : vector<8x16xf32>
    %46 = vector.extract_strided_slice %5 {offsets = [0, 80], sizes = [8, 16], strides = [1, 1]} : vector<8x128xf32> to vector<8x16xf32>
    %cst_11 = arith.constant dense<0.000000e+00> : vector<8xf32>
    %47 = vector.multi_reduction <add>, %46, %cst_11 [1] : vector<8x16xf32> to vector<8xf32>
    %48 = vector.shape_cast %47 : vector<8xf32> to vector<8x1xf32>
    %cst_12 = arith.constant 9.99999996E-13 : f32
    %49 = vector.broadcast %cst_12 : f32 to vector<8x1xf32>
    %50 = arith.maximumf %48, %49 : vector<8x1xf32>
    %51 = tpu.reciprocal %50 : vector<8x1xf32> -> vector<8x1xf32>
    %52 = vector.broadcast %51 : vector<8x1xf32> to vector<8x16xf32>
    %53 = arith.mulf %46, %52 : vector<8x16xf32>
    %54 = vector.extract_strided_slice %5 {offsets = [0, 96], sizes = [8, 16], strides = [1, 1]} : vector<8x128xf32> to vector<8x16xf32>
    %cst_13 = arith.constant dense<0.000000e+00> : vector<8xf32>
    %55 = vector.multi_reduction <add>, %54, %cst_13 [1] : vector<8x16xf32> to vector<8xf32>
    %56 = vector.shape_cast %55 : vector<8xf32> to vector<8x1xf32>
    %cst_14 = arith.constant 9.99999996E-13 : f32
    %57 = vector.broadcast %cst_14 : f32 to vector<8x1xf32>
    %58 = arith.maximumf %56, %57 : vector<8x1xf32>
    %59 = tpu.reciprocal %58 : vector<8x1xf32> -> vector<8x1xf32>
    %60 = vector.broadcast %59 : vector<8x1xf32> to vector<8x16xf32>
    %61 = arith.mulf %54, %60 : vector<8x16xf32>
    %62 = vector.extract_strided_slice %5 {offsets = [0, 112], sizes = [8, 16], strides = [1, 1]} : vector<8x128xf32> to vector<8x16xf32>
    %cst_15 = arith.constant dense<0.000000e+00> : vector<8xf32>
    %63 = vector.multi_reduction <add>, %62, %cst_15 [1] : vector<8x16xf32> to vector<8xf32>
    %64 = vector.shape_cast %63 : vector<8xf32> to vector<8x1xf32>
    %cst_16 = arith.constant 9.99999996E-13 : f32
    %65 = vector.broadcast %cst_16 : f32 to vector<8x1xf32>
    %66 = arith.maximumf %64, %65 : vector<8x1xf32>
    %67 = tpu.reciprocal %66 : vector<8x1xf32> -> vector<8x1xf32>
    %68 = vector.broadcast %67 : vector<8x1xf32> to vector<8x16xf32>
    %69 = arith.mulf %62, %68 : vector<8x16xf32>
    %70 = tpu.concatenate %13, %21, %29, %37, %45, %53, %61, %69 in 1 : vector<8x16xf32>, vector<8x16xf32>, vector<8x16xf32>, vector<8x16xf32>, vector<8x16xf32>, vector<8x16xf32>, vector<8x16xf32>, vector<8x16xf32> -> vector<8x128xf32>
    %c0_17 = arith.constant 0 : index
    %c0_18 = arith.constant 0 : index
    %71 = vector.load %arg2[%c0_17, %c0_18] : memref<8x128xf32, #tpu.memory_space<vmem>>, vector<8x128xf32>
    tpu.vector_store %arg2[%c0_17, %c0_18], %70 {strides = array<i32>} : memref<8x128xf32, #tpu.memory_space<vmem>>, vector<8x128xf32>,
    return
  }
  func.func @transform_0(%arg0: i32) -> (i32, i32) {
    %c0_i32 = arith.constant 0 : i32
    %c0_i32_0 = arith.constant 0 : i32
    return %arg0, %c0_i32 : i32, i32
  }
  func.func @transform_1(%arg0: i32) -> (i32, i32) {
    %c0_i32 = arith.constant 0 : i32
    %c0_i32_0 = arith.constant 0 : i32
    return %arg0, %c0_i32 : i32, i32
  }
}

</mosaic_0001>

<llo_original>
// kernel: tpu_custom_call.1
$region0: #{tpu_custom_call.1}
  #allocation0 [shape = 'u32[]', space=smem, size = 0x4, offset = 0x4, fixed_abs, tag = 'smem constant byte address 0x4 - core index']
  #allocation1 [shape = 'u32[72,128]{1,0:T(1,128)}', space=vmem, size = 0x9000, scoped, tag = 'internal scratch']
  %s0 = inlined_call_operand.hbm [shape: f32[16,128], index: 0, kind: input, shape index: {}]
  %s1 = inlined_call_operand.hbm [shape: f32[16,128], index: 1, kind: output, shape index: {}]
  %s2 = sld [smem:[#allocation0]]
  $region41: #{tpu_custom_call.1} parent=0
    _
  %s4 = ssub.s32 1, %s2
  %s5 = scalar_select 0, %s4, %s2
  $region1: #{tpu_custom_call.1} parent=0
    #allocation2 [shape = 'u8[8192]{0}', space=vmem, size = 0x2000, scoped, tag = 'input window, operand 0']
    #allocation3 [shape = 's32[2]{0}', space=sflag, size = 0x8, scoped, tag = 'scoped memory for tpu_custom_call.1']
    #allocation4 [shape = 's32[2]{0}', space=sflag, size = 0x8, scoped, tag = 'scoped memory for tpu_custom_call.1']
    #allocation5 [shape = 'u8[8192]{0}', space=vmem, size = 0x2000, scoped, tag = 'output window, operand 0']
    %6 = vsyncpa [#allocation3], 0
    %s7 = scalar_lea.sflag [#allocation3], 1
    %8 = vsyncpa %s7, 0
    %9 = vsyncpa [#allocation4], 0
    %s10 = scalar_lea.sflag [#allocation4], 1
    %11 = vsyncpa %s10, 0
    loop: start=0, step=1, limit=4
    $region2: #{tpu_custom_call.1} parent=1 // loop_pre_header
      _
    $region3: #{tpu_custom_call.1} parent=1 // loop_header
      %s13 = sphi 0, %s17
      %p14 = scmp.ge.s32.totalorder %s13, 4
      %s23 = sphi 0, %s25
      %s26 = sphi 0, %s23
      %s27 = sphi 0, %s26
      %s43 = sphi 0, %s27
      %s49 = sphi 0, %s51
      %s52 = sphi 0, %s49
      %s53 = sphi 0, %s52
      %s69 = sphi 0, %s53
    $region4: #{tpu_custom_call.1} parent=1 // loop_header_branch
      %16 = sbr.rel (%p14) target = $region8
    $region5: #{tpu_custom_call.1} parent=1 // loop_body
      %s18 = ssub.s32 %s13, 1
      %s19 = ssub.s32 %s13, 2
      %s20 = sadd.s32 %s13, 1
      %s21 = ssub.s32 %s13, %s20
      %p22 = scmp.eq.s32.totalorder %s21, 0
      %s24 = sadd.s32 %s23, 1
      %s25 = scalar_select %p22, %s23, %s24
      %p28 = pneg %p22
      %p29 = scmp.eq.s32.totalorder %s13, 1
      %p30 = por %p28, %p29
      %p31 = scmp.ne.s32.totalorder %s23, %s26
      %p32 = scmp.eq.s32.totalorder %s13, 0
      %p33 = por %p31, %p32
      %p34 = scmp.ne.s32.totalorder %s23, %s26
      %p35 = scmp.eq.s32.totalorder %s18, 1
      %p36 = por %p34, %p35
      %p37 = scmp.ne.s32.totalorder %s26, %s27
      %p38 = scmp.eq.s32.totalorder %s18, 0
      %p39 = por %p37, %p38
      %p40 = scmp.ne.s32.totalorder %s26, %s27
      %p41 = scmp.eq.s32.totalorder %s19, 1
      %p42 = por %p40, %p41
      %p44 = scmp.ne.s32.totalorder %s27, %s43
      %p45 = scmp.eq.s32.totalorder %s19, 0
      %p46 = por %p44, %p45
      %s47 = ssub.s32 %s13, %s20
      %p48 = scmp.eq.s32.totalorder %s47, 0
      %s50 = sadd.s32 %s49, 1
      %s51 = scalar_select %p48, %s49, %s50
      %p54 = pneg %p48
      %p55 = scmp.eq.s32.totalorder %s13, 1
      %p56 = por %p54, %p55
      %p57 = scmp.ne.s32.totalorder %s49, %s52
      %p58 = scmp.eq.s32.totalorder %s13, 0
      %p59 = por %p57, %p58
      %p60 = scmp.ne.s32.totalorder %s49, %s52
      %p61 = scmp.eq.s32.totalorder %s18, 1
      %p62 = por %p60, %p61
      %p63 = scmp.ne.s32.totalorder %s52, %s53
      %p64 = scmp.eq.s32.totalorder %s18, 0
      %p65 = por %p63, %p64
      %p66 = scmp.ne.s32.totalorder %s52, %s53
      %p67 = scmp.eq.s32.totalorder %s19, 1
      %p68 = por %p66, %p67
      %p70 = scmp.ne.s32.totalorder %s53, %s69
      %p71 = scmp.eq.s32.totalorder %s19, 0
      %p72 = por %p70, %p71
      %p73 = scmp.le.s32.totalorder 1, %s13
      %p74 = scmp.lt.s32.totalorder %s13, 3
      %p75 = pnand %p73, %p74
      %p76 = pneg %p75
      // Predicated region
      $region9: #{tpu_custom_call.1} parent=5 // pred_check
        _
      $region10: #{tpu_custom_call.1} parent=5 // pred_check_branch
        %78 = sbr.rel (%p75) target = $region12
      $region11: #{tpu_custom_call.1} parent=5 // pred_region
        %s79 = ssub.s32 %s13, 1
      $region12: #{tpu_custom_call.1} parent=5 // pred_fallthru
        _
      %p80 = scmp.lt.s32.totalorder %s13, 2
      // Predicated region
      $region13: #{tpu_custom_call.1} parent=5 // pred_check
        %p81 = pneg %p80
      $region14: #{tpu_custom_call.1} parent=5 // pred_check_branch
        %83 = sbr.rel (%p81) target = $region16
      $region15: #{tpu_custom_call.1} parent=5 // pred_region
        // Predicated region
        $region17: #{tpu_custom_call.1} parent=15 // pred_check
          %p84 = pneg %p33
        $region18: #{tpu_custom_call.1} parent=15 // pred_check_branch
          %86 = sbr.rel (%p84) target = $region20
        $region19: #{tpu_custom_call.1} parent=15 // pred_region
          %s87 = sand.u32 %s23, 1
          %s88 = scalar_lea.sflag [#allocation3], %s87
          %s89 = sand.u32 %s23, 1
          %s90 = smul.addr %s89, 8
          %s91 = scalar_lea.vmem [#allocation2], %s90
          %93 = vsyncadd %s88, 0
          %s94 = smul.addr %s13, 8
          %s95 = scalar_lea.hbm %s0, %s94
          %s97 = sshll.u32 %s95, 4
          %s98 = int_to_ptr.hbm [resolvable:$true] %s97
          %s99 = sshll.u32 %s91, 4
          %s100 = int_to_ptr.vmem [resolvable:$true] %s99
          %102 = dma.hbm_to_vmem [thread:$0]  %s98, 128, %s100, %s88
        $region20: #{tpu_custom_call.1} parent=15 // pred_fallthru
          _
      $region16: #{tpu_custom_call.1} parent=5 // pred_fallthru
        _
      %p103 = scmp.le.s32.totalorder 1, %s13
      %p104 = scmp.lt.s32.totalorder %s13, 3
      %p105 = pnand %p103, %p104
      %p106 = pneg %p105
      // Predicated region
      $region21: #{tpu_custom_call.1} parent=5 // pred_check
        _
      $region22: #{tpu_custom_call.1} parent=5 // pred_check_branch
        %108 = sbr.rel (%p105) target = $region24
      $region23: #{tpu_custom_call.1} parent=5 // pred_region
        %s109 = ssub.s32 %s13, 1
        %s110 = sand.u32 %s26, 1
        %s111 = scalar_lea.sflag [#allocation3], %s110
        %s112 = sand.u32 %s26, 1
        %s113 = smul.addr %s112, 8
        %s114 = scalar_lea.vmem [#allocation2], %s113
        // Predicated region
        $region25: #{tpu_custom_call.1} parent=23 // pred_check
          %p115 = pneg %p39
        $region26: #{tpu_custom_call.1} parent=23 // pred_check_branch
          %117 = sbr.rel (%p115) target = $region28
        $region27: #{tpu_custom_call.1} parent=23 // pred_region
          %119 = dma.done %s111, 128
        $region28: #{tpu_custom_call.1} parent=23 // pred_fallthru
          _
        %s120 = sand.u32 %s26, 1
        %s121 = scalar_lea.sflag [#allocation3], %s120
        %s122 = sand.u32 %s26, 1
        %s123 = smul.addr %s122, 8
        %s124 = scalar_lea.vmem [#allocation2], %s123
        %p125 = pneg %p39
        %p126 = pneg %p36
        %p127 = pneg %p65
        %p128 = pneg %p62
        %s129 = sand.u32 %s52, 1
        %s130 = scalar_lea.sflag [#allocation4], %s129
        %s131 = sand.u32 %s52, 1
        %s132 = smul.addr %s131, 8
        %s133 = scalar_lea.vmem [#allocation5], %s132
        %v134 = vld [vmem:[%s114] sm:$0xff]
        %v135 = vxor.u32 %v134, 2147483648
        %v136 = vmul.f32 %v135, 1.442695
        %v137 = vpow.pop %v136
        %v138 = vadd.f32 %v137, 1.0
        %v139 = vrcp.pop %v138
        %v140 = vmul.f32 %v138, %v139
        %v141 = vsub.f32 1.0, %v140
        %v142 = vmul.f32 %v139, %v141
        %v143 = vadd.f32 %v139, %v142
        %vm144 = vweird.f32 %v138
        %vm145 = vweird.f32 %v139
        %vm146 = vmor %vm144, %vm145
        %v147 = vsel %vm146, %v139, %v143
        %v148 = vand.u32 2147483647, %v138
        %vm149 = vcmp.eq.f32.partialorder %v148, 8.507059e+37
        %v150 = vand.u32 %v138, 2147483648
        %v151 = vor.u32 1.1754944e-38, %v150
        %v152 = vsel %vm149, %v151, %v147
        %v153 = vmul.f32 1.0, %v152
        %vm154 = vcmask 130048
        %v155 = vsel %vm154, %v153, 0.0
        %156 = vadd.xlane.f32.xlu0 %v155
        %v157 = vpop.xlane.xlu0 %156
        %v158 = vmax.f32 %v157, 1e-12
        %v159 = vrcp.pop %v158
        %v160 = vmul.f32 %v158, %v159
        %v161 = vsub.f32 1.0, %v160
        %v162 = vmul.f32 %v159, %v161
        %v163 = vadd.f32 %v159, %v162
        %vm164 = vweird.f32 %v158
        %vm165 = vweird.f32 %v159
        %vm166 = vmor %vm164, %vm165
        %v167 = vsel %vm166, %v159, %v163
        %v168 = vand.u32 2147483647, %v158
        %vm169 = vcmp.eq.f32.partialorder %v168, 8.507059e+37
        %v170 = vand.u32 %v158, 2147483648
        %v171 = vor.u32 1.1754944e-38, %v170
        %v172 = vsel %vm169, %v171, %v167
        %v173 = vmul.f32 %v153, %v172
        %175 = vrot.lane.b32.xlu0 %v153, 112
        %v176 = vpop.permute.xlu0 %175
        %v178 = vsel %vm154, %v176, 0.0
        %179 = vadd.xlane.f32.xlu0 %v178
        %v180 = vpop.xlane.xlu0 %179
        %v181 = vmax.f32 %v180, 1e-12
        %v182 = vrcp.pop %v181
        %v183 = vmul.f32 %v181, %v182
        %v184 = vsub.f32 1.0, %v183
        %v185 = vmul.f32 %v182, %v184
        %v186 = vadd.f32 %v182, %v185
        %vm187 = vweird.f32 %v181
        %vm188 = vweird.f32 %v182
        %vm189 = vmor %vm187, %vm188
        %v190 = vsel %vm189, %v182, %v186
        %v191 = vand.u32 2147483647, %v181
        %vm192 = vcmp.eq.f32.partialorder %v191, 8.507059e+37
        %v193 = vand.u32 %v181, 2147483648
        %v194 = vor.u32 1.1754944e-38, %v193
        %v195 = vsel %vm192, %v194, %v190
        %v196 = vmul.f32 %v153, %v195
        %197 = vrot.lane.b32.xlu0 %v153, 96
        %v198 = vpop.permute.xlu0 %197
        %v200 = vsel %vm154, %v198, 0.0
        %201 = vadd.xlane.f32.xlu0 %v200
        %v202 = vpop.xlane.xlu0 %201
        %v203 = vmax.f32 %v202, 1e-12
        %v204 = vrcp.pop %v203
        %v205 = vmul.f32 %v203, %v204
        %v206 = vsub.f32 1.0, %v205
        %v207 = vmul.f32 %v204, %v206
        %v208 = vadd.f32 %v204, %v207
        %vm209 = vweird.f32 %v203
        %vm210 = vweird.f32 %v204
        %vm211 = vmor %vm209, %vm210
        %v212 = vsel %vm211, %v204, %v208
        %v213 = vand.u32 2147483647, %v203
        %vm214 = vcmp.eq.f32.partialorder %v213, 8.507059e+37
        %v215 = vand.u32 %v203, 2147483648
        %v216 = vor.u32 1.1754944e-38, %v215
        %v217 = vsel %vm214, %v216, %v212
        %v218 = vmul.f32 %v153, %v217
        %219 = vrot.lane.b32.xlu0 %v153, 80
        %v220 = vpop.permute.xlu0 %219
        %v222 = vsel %vm154, %v220, 0.0
        %223 = vadd.xlane.f32.xlu0 %v222
        %v224 = vpop.xlane.xlu0 %223
        %v225 = vmax.f32 %v224, 1e-12
        %v226 = vrcp.pop %v225
        %v227 = vmul.f32 %v225, %v226
        %v228 = vsub.f32 1.0, %v227
        %v229 = vmul.f32 %v226, %v228
        %v230 = vadd.f32 %v226, %v229
        %vm231 = vweird.f32 %v225
        %vm232 = vweird.f32 %v226
        %vm233 = vmor %vm231, %vm232
        %v234 = vsel %vm233, %v226, %v230
        %v235 = vand.u32 2147483647, %v225
        %vm236 = vcmp.eq.f32.partialorder %v235, 8.507059e+37
        %v237 = vand.u32 %v225, 2147483648
        %v238 = vor.u32 1.1754944e-38, %v237
        %v239 = vsel %vm236, %v238, %v234
        %v240 = vmul.f32 %v153, %v239
        %241 = vrot.lane.b32.xlu0 %v153, 64
        %v242 = vpop.permute.xlu0 %241
        %v244 = vsel %vm154, %v242, 0.0
        %245 = vadd.xlane.f32.xlu0 %v244
        %v246 = vpop.xlane.xlu0 %245
        %v247 = vmax.f32 %v246, 1e-12
        %v248 = vrcp.pop %v247
        %v249 = vmul.f32 %v247, %v248
        %v250 = vsub.f32 1.0, %v249
        %v251 = vmul.f32 %v248, %v250
        %v252 = vadd.f32 %v248, %v251
        %vm253 = vweird.f32 %v247
        %vm254 = vweird.f32 %v248
        %vm255 = vmor %vm253, %vm254
        %v256 = vsel %vm255, %v248, %v252
        %v257 = vand.u32 2147483647, %v247
        %vm258 = vcmp.eq.f32.partialorder %v257, 8.507059e+37
        %v259 = vand.u32 %v247, 2147483648
        %v260 = vor.u32 1.1754944e-38, %v259
        %v261 = vsel %vm258, %v260, %v256
        %v262 = vmul.f32 %v153, %v261
        %263 = vrot.lane.b32.xlu0 %v153, 48
        %v264 = vpop.permute.xlu0 %263
        %v266 = vsel %vm154, %v264, 0.0
        %267 = vadd.xlane.f32.xlu0 %v266
        %v268 = vpop.xlane.xlu0 %267
        %v269 = vmax.f32 %v268, 1e-12
        %v270 = vrcp.pop %v269
        %v271 = vmul.f32 %v269, %v270
        %v272 = vsub.f32 1.0, %v271
        %v273 = vmul.f32 %v270, %v272
        %v274 = vadd.f32 %v270, %v273
        %vm275 = vweird.f32 %v269
        %vm276 = vweird.f32 %v270
        %vm277 = vmor %vm275, %vm276
        %v278 = vsel %vm277, %v270, %v274
        %v279 = vand.u32 2147483647, %v269
        %vm280 = vcmp.eq.f32.partialorder %v279, 8.507059e+37
        %v281 = vand.u32 %v269, 2147483648
        %v282 = vor.u32 1.1754944e-38, %v281
        %v283 = vsel %vm280, %v282, %v278
        %v284 = vmul.f32 %v153, %v283
        %285 = vrot.lane.b32.xlu0 %v153, 32
        %v286 = vpop.permute.xlu0 %285
        %v288 = vsel %vm154, %v286, 0.0
        %289 = vadd.xlane.f32.xlu0 %v288
        %v290 = vpop.xlane.xlu0 %289
        %v291 = vmax.f32 %v290, 1e-12
        %v292 = vrcp.pop %v291
        %v293 = vmul.f32 %v291, %v292
        %v294 = vsub.f32 1.0, %v293
        %v295 = vmul.f32 %v292, %v294
        %v296 = vadd.f32 %v292, %v295
        %vm297 = vweird.f32 %v291
        %vm298 = vweird.f32 %v292
        %vm299 = vmor %vm297, %vm298
        %v300 = vsel %vm299, %v292, %v296
        %v301 = vand.u32 2147483647, %v291
        %vm302 = vcmp.eq.f32.partialorder %v301, 8.507059e+37
        %v303 = vand.u32 %v291, 2147483648
        %v304 = vor.u32 1.1754944e-38, %v303
        %v305 = vsel %vm302, %v304, %v300
        %v306 = vmul.f32 %v153, %v305
        %307 = vrot.lane.b32.xlu0 %v153, 16
        %v308 = vpop.permute.xlu0 %307
        %v310 = vsel %vm154, %v308, 0.0
        %311 = vadd.xlane.f32.xlu0 %v310
        %v312 = vpop.xlane.xlu0 %311
        %v313 = vmax.f32 %v312, 1e-12
        %v314 = vrcp.pop %v313
        %v315 = vmul.f32 %v313, %v314
        %v316 = vsub.f32 1.0, %v315
        %v317 = vmul.f32 %v314, %v316
        %v318 = vadd.f32 %v314, %v317
        %vm319 = vweird.f32 %v313
        %vm320 = vweird.f32 %v314
        %vm321 = vmor %vm319, %vm320
        %v322 = vsel %vm321, %v314, %v318
        %v323 = vand.u32 2147483647, %v313
        %vm324 = vcmp.eq.f32.partialorder %v323, 8.507059e+37
        %v325 = vand.u32 %v313, 2147483648
        %v326 = vor.u32 1.1754944e-38, %v325
        %v327 = vsel %vm324, %v326, %v322
        %v328 = vmul.f32 %v153, %v327
        %v329 = vsel %vm154, %v173, %v196
        %vm330 = vcmask 261120
        %v331 = vsel %vm330, %v329, %v218
        %vm332 = vcmask 392192
        %v333 = vsel %vm332, %v331, %v240
        %vm334 = vcmask 523264
        %v335 = vsel %vm334, %v333, %v262
        %vm336 = vcmask 654336
        %v337 = vsel %vm336, %v335, %v284
        %vm338 = vcmask 785408
        %v339 = vsel %vm338, %v337, %v306
        %vm340 = vcmask 916480
        %v341 = vsel %vm340, %v339, %v328
        %342 = vst [vmem:[%s133] sm:$0xff] %v341
        %s343 = sand.u32 %s52, 1
        %s344 = scalar_lea.sflag [#allocation4], %s343
        %s345 = sand.u32 %s52, 1
        %s346 = smul.addr %s345, 8
        %s347 = scalar_lea.vmem [#allocation5], %s346
        // Predicated region
        $region29: #{tpu_custom_call.1} parent=23 // pred_check
          %p348 = pneg %p62
        $region30: #{tpu_custom_call.1} parent=23 // pred_check_branch
          %350 = sbr.rel (%p348) target = $region32
        $region31: #{tpu_custom_call.1} parent=23 // pred_region
          %352 = vsyncadd %s344, 0
          %s353 = smul.addr %s18, 8
          %s354 = scalar_lea.hbm %s1, %s353
          %s356 = sshll.u32 %s347, 4
          %s357 = int_to_ptr.vmem [resolvable:$true] %s356
          %s358 = sshll.u32 %s354, 4
          %s359 = int_to_ptr.hbm [resolvable:$true] %s358
          %361 = dma.vmem_to_hbm [thread:$0]  %s357, 128, %s359, %s344
        $region32: #{tpu_custom_call.1} parent=23 // pred_fallthru
          _
      $region24: #{tpu_custom_call.1} parent=5 // pred_fallthru
        _
      %p362 = scmp.le.s32.totalorder 2, %s13
      // Predicated region
      $region33: #{tpu_custom_call.1} parent=5 // pred_check
        %p363 = pneg %p362
      $region34: #{tpu_custom_call.1} parent=5 // pred_check_branch
        %365 = sbr.rel (%p363) target = $region36
      $region35: #{tpu_custom_call.1} parent=5 // pred_region
        %s366 = ssub.s32 %s13, 2
        // Predicated region
        $region37: #{tpu_custom_call.1} parent=35 // pred_check
          %p367 = pneg %p68
        $region38: #{tpu_custom_call.1} parent=35 // pred_check_branch
          %369 = sbr.rel (%p367) target = $region40
        $region39: #{tpu_custom_call.1} parent=35 // pred_region
          %s370 = sand.u32 %s53, 1
          %s371 = scalar_lea.sflag [#allocation4], %s370
          %s372 = sand.u32 %s53, 1
          %s373 = smul.addr %s372, 8
          %s374 = scalar_lea.vmem [#allocation5], %s373
          %376 = dma.done %s371, 128
        $region40: #{tpu_custom_call.1} parent=35 // pred_fallthru
          _
      $region36: #{tpu_custom_call.1} parent=5 // pred_fallthru
        _
    $region6: #{tpu_custom_call.1} parent=1 // loop_footer
      %s17 = sadd.s32 1, %s13
    $region7: #{tpu_custom_call.1} parent=1 // loop_footer_branch
      %12 = sbr.rel target = $region3
    $region8: #{tpu_custom_call.1} parent=1 // loop_exit
      _
    %377 = vsyncpa [#allocation3], 1
    %s378 = scalar_lea.sflag [#allocation3], 1
    %379 = vsyncpa %s378, 1
    %380 = vsyncpa [#allocation4], 1
    %s381 = scalar_lea.sflag [#allocation4], 1
    %382 = vsyncpa %s381, 1

</llo_original>
